<compile_context>
chip_gen: v5e
topology: v5e:2x2
jax: 0.10.0
libtpu: 0.0.40
codegen_flags: <defaults>
</compile_context>

<pallas_src>
import functools

import jax
import jax.numpy as jnp
from jax.experimental import pallas as pl
from jax.experimental.pallas import tpu as pltpu


_TARGET_BLOCK_BYTES = 2 * 1024 * 1024   # ~2 MiB blocks: near the HBM-roofline knee, fits everywhere
_MONO_BLOCK_LIMIT = 4 * 1024 * 1024     # above this (at the minimum channel tile) chunk the HW axis
_VMEM_LIMIT = 32 * 1024 * 1024
_LOW_PRECISION = (jnp.bfloat16, jnp.float16)


def _compute_dtype(dt):
    """Elementwise pass runs in the input dtype when it is bf16/f16 (halves
    VALU pressure on v6e/v7x); statistics always stay in f32."""
    for lp in _LOW_PRECISION:
        if dt == lp:
            return lp
    return jnp.float32


def _sigmoid(z):
    # sigmoid(z) == 0.5*tanh(0.5*z) + 0.5 exactly; tanh is a single EUP op,
    # avoiding an exp + full-precision reciprocal on the VPU.
    return 0.5 * jnp.tanh(0.5 * z) + 0.5


# --------------------------------------------------------------------------
# Kernels
# --------------------------------------------------------------------------

def _evonorm_nl_kernel(x_ref, p_ref, o_ref, *, eps):
    """Fused path: full HW resident.  x_ref: (1, TC, HW); p_ref: (3, TC, 1)
    with rows [v, weight, bias]."""
    xf = x_ref[...].astype(jnp.float32)
    hw = xf.shape[-1]

    # Exact two-pass spatial statistics (matches torch.std numerics; the tile
    # is already in VMEM so the second pass costs no HBM traffic).
    mean = jnp.mean(xf, axis=-1, keepdims=True)
    d = xf - mean
    var = jnp.sum(d * d, axis=-1, keepdims=True) * (1.0 / (hw - 1))
    std = jnp.sqrt(jnp.maximum(var, 0.0))

    p = p_ref[...].astype(jnp.float32)
    v, w, b = p[0:1], p[1:2], p[2:3]

    # Fold the divide and the weight into one per-channel scale; the exact
    # reciprocal acts on a tiny (1, TC, 1) tensor, effectively free.
    scale = pl.reciprocal(std + eps, approx=False) * w

    cd = _compute_dtype(x_ref.dtype)
    xc = xf if cd == jnp.float32 else x_ref[...].astype(cd)
    sig = _sigmoid(v.astype(cd) * xc)
    out = xc * sig * scale.astype(cd) + b.astype(cd)
    o_ref[...] = out.astype(o_ref.dtype)


def _evonorm_stats_kernel(x_ref, inv_ref, mean_ref, m2_ref, *, eps, hw_total):
    """Chunked-HW stats pass.  x_ref: (1, TC, THW); inv_ref: (1, TC, 1) f32
    output = 1/(std+eps); mean_ref/m2_ref: (1, TC, 1) f32 scratch."""
    h = pl.program_id(2)

    @pl.when(h == 0)
    def _():
        mean_ref[...] = jnp.zeros_like(mean_ref)
        m2_ref[...] = jnp.zeros_like(m2_ref)

    x = x_ref[...].astype(jnp.float32)
    thw = x.shape[-1]

    # Exact two-pass stats inside the chunk, combined across chunks with
    # Chan's parallel formula (numerically stable, no sum-of-squares
    # cancellation even for 10^5-10^6 spatial elements).
    c_mean = jnp.mean(x, axis=-1, keepdims=True)
    dx = x - c_mean
    c_m2 = jnp.sum(dx * dx, axis=-1, keepdims=True)

    n_a = (h * thw).astype(jnp.float32)
    n_b = float(thw)
    n_ab = n_a + n_b
    delta = c_mean - mean_ref[...]
    mean_ref[...] = mean_ref[...] + delta * (n_b / n_ab)
    m2_ref[...] = m2_ref[...] + c_m2 + (delta * delta) * (n_a * (n_b / n_ab))

    @pl.when(h == pl.num_programs(2) - 1)
    def _():
        var = m2_ref[...] * (1.0 / (hw_total - 1))
        std = jnp.sqrt(jnp.maximum(var, 0.0))
        inv_ref[...] = pl.reciprocal(std + eps, approx=False)


def _evonorm_norm_kernel(x_ref, p_ref, inv_ref, o_ref):
    """Chunked-HW normalize pass.  x_ref: (1, TC, THW); p_ref: (3, TC, 1)
    rows [v, weight, bias]; inv_ref: (1, TC, 1) f32 = 1/(std+eps)."""
    p = p_ref[...].astype(jnp.float32)
    v, w, b = p[0:1], p[1:2], p[2:3]
    scale = inv_ref[...] * w

    cd = _compute_dtype(x_ref.dtype)
    xc = x_ref[...].astype(cd)
    sig = _sigmoid(v.astype(cd) * xc)
    out = xc * sig * scale.astype(cd) + b.astype(cd)
    o_ref[...] = out.astype(o_ref.dtype)


def _evonorm_affine_kernel(x_ref, p_ref, o_ref):
    """nonlinearity=False path.  x_ref: (1, TC, THW); p_ref: (2, TC, 1)
    rows [weight, bias]."""
    cd = _compute_dtype(x_ref.dtype)
    x = x_ref[...].astype(cd)
    p = p_ref[...].astype(cd)
    o_ref[...] = (x * p[0:1] + p[1:2]).astype(o_ref.dtype)


# --------------------------------------------------------------------------
# Tiling helpers
# --------------------------------------------------------------------------

def _pick_channel_tile(C, N, HW, itemsize, *, align,
                       target_block_bytes=_TARGET_BLOCK_BYTES, min_steps=8):
    """Channel tile: divides C, multiple of `align` (dtype-aware sublane
    packing), block <= target, and capped so N*(C//tc) >= min_steps whenever
    possible (megacore + pipeline occupancy)."""
    if C % align != 0:
        return C   # full-channel block (full-dim blocks are exempt from (8,128))
    cands = [t for t in range(align, C + 1, align) if C % t == 0]
    max_tc = max(align, target_block_bytes // max(1, HW * itemsize))
    good = [t for t in cands if t <= max_tc] or [align]
    enough = [t for t in good if N * (C // t) >= min_steps]
    if enough:
        return max(enough)
    return min(good)   # grid-starved regime: maximize step count


def _pick_hw_chunk(HW, tc, itemsize, target_block_bytes=_TARGET_BLOCK_BYTES):
    """Largest divisor of HW that is a multiple of 128 (lane constraint) and
    keeps a (1, tc, thw) block under the target.  None if no such divisor."""
    max_thw = max(128, target_block_bytes // max(1, tc * itemsize))
    best = None
    for cand in range(128, min(HW, max_thw) + 1, 128):
        if HW % cand == 0:
            best = cand
    return best


# --------------------------------------------------------------------------
# Wrapper
# --------------------------------------------------------------------------

def evonorm2d(x, weight, bias, v=None, *, eps=1e-5, nonlinearity=True, group=32,
              target_block_bytes=_TARGET_BLOCK_BYTES,
              max_mono_block_bytes=_MONO_BLOCK_LIMIT):
    """x: (N, C, H, W); weight/bias/v: (1, C, 1, 1). Mirrors EvoNorm2d.forward."""
    N, C, H, W = x.shape
    HW = H * W
    itemsize = x.dtype.itemsize
    align = max(8, 32 // itemsize)   # sublane packing: 8 f32, 16 bf16/f16, 32 int8

    x3 = x.reshape(N, C, HW)
    w_row = weight.reshape(1, C, 1)
    b_row = bias.reshape(1, C, 1)

    out_shape3 = jax.ShapeDtypeStruct((N, C, HW), x.dtype)
    cp2 = pltpu.CompilerParams(
        dimension_semantics=("parallel", "parallel"),
        vmem_limit_bytes=_VMEM_LIMIT)
    cp3_par = pltpu.CompilerParams(
        dimension_semantics=("parallel", "parallel", "parallel"),
        vmem_limit_bytes=_VMEM_LIMIT)
    cp3_red = pltpu.CompilerParams(
        dimension_semantics=("parallel", "parallel", "arbitrary"),
        vmem_limit_bytes=_VMEM_LIMIT)

    if not nonlinearity:
        params = jnp.concatenate([w_row, b_row], axis=0)          # (2, C, 1)
        tc = _pick_channel_tile(C, N, HW, itemsize, align=align,
                                target_block_bytes=target_block_bytes)
        thw, n_hw = HW, 1
        if align * HW * itemsize > max_mono_block_bytes and C % align == 0:
            t = _pick_hw_chunk(HW, align, itemsize, target_block_bytes)
            if t is not None and HW // t >= 2:
                tc, thw, n_hw = align, t, HW // t
        grid = (C // tc, N, n_hw)
        x_spec = pl.BlockSpec((1, tc, thw), lambda c, n, h: (n, c, h))
        p_spec = pl.BlockSpec((2, tc, 1), lambda c, n, h: (0, c, 0))
        out = pl.pallas_call(
            _evonorm_affine_kernel,
            out_shape=out_shape3,
            grid_spec=pltpu.PrefetchScalarGridSpec(
                num_scalar_prefetch=0, grid=grid,
                in_specs=[x_spec, p_spec], out_specs=x_spec),
            compiler_params=cp3_par,
        )(x3, params)
        return out.reshape(N, C, H, W)

    # nonlinearity=True (default EvoNorm2d forward)
    assert C % group == 0, "num_features must be divisible by group"
    assert HW > 1, "torch.std over a single spatial element is NaN"
    params = jnp.concatenate([v.reshape(1, C, 1), w_row, b_row], axis=0)   # (3, C, 1)

    thw = None
    if align * HW * itemsize > max_mono_block_bytes and C % align == 0:
        thw = _pick_hw_chunk(HW, align, itemsize, target_block_bytes)
        if thw is not None and HW // thw < 2:
            thw = None
    # TODO(synk): huge HW with HW % 128 != 0 (or C % align != 0) still falls
    # back to the monolithic block and may need a larger vmem_limit.

    if thw is None:
        # Fused single-call path: full HW per block.
        tc = _pick_channel_tile(C, N, HW, itemsize, align=align,
                                target_block_bytes=target_block_bytes)
        grid = (C // tc, N)   # params constant along inner n -> no per-step refetch
        x_spec = pl.BlockSpec((1, tc, HW), lambda c, n: (n, c, 0))
        p_spec = pl.BlockSpec((3, tc, 1), lambda c, n: (0, c, 0))
        out = pl.pallas_call(
            functools.partial(_evonorm_nl_kernel, eps=eps),
            out_shape=out_shape3,
            grid_spec=pltpu.PrefetchScalarGridSpec(
                num_scalar_prefetch=0, grid=grid,
                in_specs=[x_spec, p_spec], out_specs=x_spec),
            compiler_params=cp2,
        )(x3, params)
    else:
        # Chunked-HW path: stats kernel (Chan-combined) + normalize kernel.
        tc = align
        n_hw = HW // thw
        grid = (C // tc, N, n_hw)
        x_spec = pl.BlockSpec((1, tc, thw), lambda c, n, h: (n, c, h))
        stat_spec = pl.BlockSpec((1, tc, 1), lambda c, n, h: (n, c, 0))
        p_spec = pl.BlockSpec((3, tc, 1), lambda c, n, h: (0, c, 0))

        inv_std = pl.pallas_call(
            functools.partial(_evonorm_stats_kernel, eps=eps, hw_total=HW),
            out_shape=jax.ShapeDtypeStruct((N, C, 1), jnp.float32),
            grid_spec=pltpu.PrefetchScalarGridSpec(
                num_scalar_prefetch=0, grid=grid,
                in_specs=[x_spec], out_specs=stat_spec,
                scratch_shapes=[pltpu.VMEM((1, tc, 1), jnp.float32),
                                pltpu.VMEM((1, tc, 1), jnp.float32)]),
            compiler_params=cp3_red,
        )(x3)

        out = pl.pallas_call(
            _evonorm_norm_kernel,
            out_shape=out_shape3,
            grid_spec=pltpu.PrefetchScalarGridSpec(
                num_scalar_prefetch=0, grid=grid,
                in_specs=[x_spec, p_spec, stat_spec], out_specs=x_spec),
            compiler_params=cp3_par,
        )(x3, params, inv_std)

    return out.reshape(N, C, H, W)


def evonorm2d_ref(x, weight, bias, v, *, eps=1e-5, group=32):
    # pure-JAX reference mirroring the PyTorch code
    N, C, H, W = x.shape
    xg = x.reshape(N, group, C // group, H, W)
    std = jnp.std(xg, axis=(3, 4), keepdims=True, ddof=1)   # unbiased
    std = (std + eps).reshape(N, C, 1, 1)
    num = x * jax.nn.sigmoid(v * x)
    return num / std * weight + bias


if __name__ == "__main__":
    key = jax.random.PRNGKey(0)
    kx, kw, kb, kv, kx2 = jax.random.split(key, 5)

    N, C, H, W = 2, 32, 16, 16
    group = 32
    eps = 1e-5

    x = jax.random.normal(kx, (N, C, H, W), dtype=jnp.float32)
    weight = jax.random.normal(kw, (1, C, 1, 1), dtype=jnp.float32)
    bias = jax.random.normal(kb, (1, C, 1, 1), dtype=jnp.float32)
    v = jax.random.normal(kv, (1, C, 1, 1), dtype=jnp.float32)

    # 1) nonlinearity=True, fused (full-HW) path
    out = jax.block_until_ready(
        evonorm2d(x, weight, bias, v, eps=eps, nonlinearity=True, group=group))
    ref = evonorm2d_ref(x, weight, bias, v, eps=eps, group=group)
    assert out.shape == (N, C, H, W)
    assert jnp.allclose(out, ref, atol=1e-5, rtol=1e-5), float(
        jnp.max(jnp.abs(out - ref)))

    # 2) nonlinearity=False (pure affine) path
    out_aff = jax.block_until_ready(
        evonorm2d(x, weight, bias, eps=eps, nonlinearity=False, group=group))
    assert jnp.allclose(out_aff, x * weight + bias, atol=1e-5, rtol=1e-5)

    # 3) chunked-HW (stats + normalize) path, forced at a small shape via tiny
    #    block budgets; mean-shifted input exercises the stable statistics.
    H2, W2 = 16, 32   # HW = 512, divisible by 128
    x2 = jax.random.normal(kx2, (N, C, H2, W2), dtype=jnp.float32) * 2.0 + 8.0
    out2 = jax.block_until_ready(
        evonorm2d(x2, weight, bias, v, eps=eps, nonlinearity=True, group=group,
                  target_block_bytes=4096, max_mono_block_bytes=4096))
    ref2 = evonorm2d_ref(x2, weight, bias, v, eps=eps, group=group)
    assert jnp.allclose(out2, ref2, atol=1e-5, rtol=1e-5), float(
        jnp.max(jnp.abs(out2 - ref2)))

    print("KERNEL_OK")
</pallas_src>

<mosaic_0001>
module attributes {stable_mosaic.version = 11 : i64} {
  func.func @_evonorm_nl_kernel(%arg0: i32, %arg1: i32, %arg2: memref<1x8x256xf32, #tpu.memory_space<vmem>>, %arg3: memref<3x8x1xf32, #tpu.memory_space<vmem>>, %arg4: memref<1x8x256xf32, #tpu.memory_space<vmem>>) attributes {dimension_semantics = [#tpu.dimension_semantics<parallel>, #tpu.dimension_semantics<parallel>], iteration_bounds = array<i64: 4, 2>, scalar_prefetch = 0 : i64, scratch_operands = 0 : i64, tpu.core_type = #tpu.core_type<tc>, window_params = [{transform_indices = @transform_0, window_bounds = array<i64: 1, 8, 256>}, {transform_indices = @transform_1, window_bounds = array<i64: 3, 8, 1>}, {transform_indices = @transform_2, window_bounds = array<i64: 1, 8, 256>}]} {
    %c0 = arith.constant 0 : index
    %c0_0 = arith.constant 0 : index
    %c0_1 = arith.constant 0 : index
    %0 = vector.load %arg2[%c0, %c0_0, %c0_1] : memref<1x8x256xf32, #tpu.memory_space<vmem>>, vector<1x8x256xf32>
    %cst = arith.constant dense<0.000000e+00> : vector<1x8xf32>
    %1 = vector.multi_reduction <add>, %0, %cst [2] : vector<1x8x256xf32> to vector<1x8xf32>
    %2 = vector.shape_cast %1 : vector<1x8xf32> to vector<1x8x1xf32>
    %cst_2 = arith.constant 2.560000e+02 : f32
    %3 = vector.broadcast %cst_2 : f32 to vector<1x8x1xf32>
    %4 = arith.divf %2, %3 : vector<1x8x1xf32>
    %5 = vector.broadcast %4 : vector<1x8x1xf32> to vector<1x8x256xf32>
    %6 = arith.subf %0, %5 : vector<1x8x256xf32>
    %7 = arith.mulf %6, %6 : vector<1x8x256xf32>
    %cst_3 = arith.constant dense<0.000000e+00> : vector<1x8xf32>
    %8 = vector.multi_reduction <add>, %7, %cst_3 [2] : vector<1x8x256xf32> to vector<1x8xf32>
    %9 = vector.shape_cast %8 : vector<1x8xf32> to vector<1x8x1xf32>
    %cst_4 = arith.constant 0.00392156886 : f32
    %10 = vector.broadcast %cst_4 : f32 to vector<1x8x1xf32>
    %11 = arith.mulf %9, %10 : vector<1x8x1xf32>
    %cst_5 = arith.constant 0.000000e+00 : f32
    %12 = vector.broadcast %cst_5 : f32 to vector<1x8x1xf32>
    %13 = arith.maximumf %11, %12 : vector<1x8x1xf32>
    %14 = math.sqrt %13 : vector<1x8x1xf32>
    %c0_6 = arith.constant 0 : index
    %c0_7 = arith.constant 0 : index
    %c0_8 = arith.constant 0 : index
    %15 = vector.load %arg3[%c0_6, %c0_7, %c0_8] : memref<3x8x1xf32, #tpu.memory_space<vmem>>, vector<3x8x1xf32>
    %16 = vector.extract_strided_slice %15 {offsets = [0, 0, 0], sizes = [1, 8, 1], strides = [1, 1, 1]} : vector<3x8x1xf32> to vector<1x8x1xf32>
    %17 = vector.extract_strided_slice %15 {offsets = [1, 0, 0], sizes = [1, 8, 1], strides = [1, 1, 1]} : vector<3x8x1xf32> to vector<1x8x1xf32>
    %18 = vector.extract_strided_slice %15 {offsets = [2, 0, 0], sizes = [1, 8, 1], strides = [1, 1, 1]} : vector<3x8x1xf32> to vector<1x8x1xf32>
    %cst_9 = arith.constant 9.99999974E-6 : f32
    %19 = vector.broadcast %cst_9 : f32 to vector<1x8x1xf32>
    %20 = arith.addf %14, %19 : vector<1x8x1xf32>
    %21 = tpu.reciprocal %20 : vector<1x8x1xf32> -> vector<1x8x1xf32>
    %22 = arith.mulf %21, %17 : vector<1x8x1xf32>
    %23 = vector.broadcast %16 : vector<1x8x1xf32> to vector<1x8x256xf32>
    %24 = arith.mulf %23, %0 : vector<1x8x256xf32>
    %cst_10 = arith.constant 5.000000e-01 : f32
    %25 = vector.broadcast %cst_10 : f32 to vector<1x8x256xf32>
    %26 = arith.mulf %25, %24 : vector<1x8x256xf32>
    %27 = math.tanh %26 : vector<1x8x256xf32>
    %cst_11 = arith.constant 5.000000e-01 : f32
    %28 = vector.broadcast %cst_11 : f32 to vector<1x8x256xf32>
    %29 = arith.mulf %28, %27 : vector<1x8x256xf32>
    %cst_12 = arith.constant 5.000000e-01 : f32
    %30 = vector.broadcast %cst_12 : f32 to vector<1x8x256xf32>
    %31 = arith.addf %29, %30 : vector<1x8x256xf32>
    %32 = arith.mulf %0, %31 : vector<1x8x256xf32>
    %33 = vector.broadcast %22 : vector<1x8x1xf32> to vector<1x8x256xf32>
    %34 = arith.mulf %32, %33 : vector<1x8x256xf32>
    %35 = vector.broadcast %18 : vector<1x8x1xf32> to vector<1x8x256xf32>
    %36 = arith.addf %34, %35 : vector<1x8x256xf32>
    %c0_13 = arith.constant 0 : index
    %c0_14 = arith.constant 0 : index
    %c0_15 = arith.constant 0 : index
    %37 = vector.load %arg4[%c0_13, %c0_14, %c0_15] : memref<1x8x256xf32, #tpu.memory_space<vmem>>, vector<1x8x256xf32>
    tpu.vector_store %arg4[%c0_13, %c0_14, %c0_15], %36 {strides = array<i32>} : memref<1x8x256xf32, #tpu.memory_space<vmem>>, vector<1x8x256xf32>,
    return
  }
  func.func @transform_0(%arg0: i32, %arg1: i32) -> (i32, i32, i32) {
    %c0_i32 = arith.constant 0 : i32
    %c0_i32_0 = arith.constant 0 : i32
    return %arg1, %arg0, %c0_i32 : i32, i32, i32
  }
  func.func @transform_1(%arg0: i32, %arg1: i32) -> (i32, i32, i32) {
    %c0_i32 = arith.constant 0 : i32
    %c0_i32_0 = arith.constant 0 : i32
    %c0_i32_1 = arith.constant 0 : i32
    return %c0_i32, %arg0, %c0_i32_0 : i32, i32, i32
  }
  func.func @transform_2(%arg0: i32, %arg1: i32) -> (i32, i32, i32) {
    %c0_i32 = arith.constant 0 : i32
    %c0_i32_0 = arith.constant 0 : i32
    return %arg1, %arg0, %c0_i32 : i32, i32, i32
  }
}

</mosaic_0001>

<llo_original>
// kernel: tpu_custom_call.1
$region0: #{tpu_custom_call.1}
  #allocation0 [shape = 'u32[]', space=smem, size = 0x4, offset = 0x4, fixed_abs, tag = 'smem constant byte address 0x4 - core index']
  #allocation1 [shape = 'u32[72,128]{1,0:T(1,128)}', space=vmem, size = 0x9000, scoped, tag = 'internal scratch']
  %s0 = inlined_call_operand.hbm [shape: f32[2,32,256], index: 0, kind: input, shape index: {}]
  %s1 = inlined_call_operand.vmem [shape: f32[3,32,1], index: 1, kind: input, shape index: {}]
  %s2 = inlined_call_operand.hbm [shape: f32[2,32,256], index: 2, kind: output, shape index: {}]
  %s3 = sld [smem:[#allocation0]]
  $region83: #{tpu_custom_call.1} parent=0
    _
  %s5 = ssub.s32 1, %s3
  %s6 = scalar_select 0, %s5, %s3
  $region1: #{tpu_custom_call.1} parent=0
    #allocation2 [shape = 'u8[16384]{0}', space=vmem, size = 0x4000, scoped, tag = 'input window, operand 0']
    #allocation3 [shape = 's32[2]{0}', space=sflag, size = 0x8, scoped, tag = 'scoped memory for tpu_custom_call.1']
    #allocation4 [shape = 's32[2]{0}', space=sflag, size = 0x8, scoped, tag = 'scoped memory for tpu_custom_call.1']
    #allocation5 [shape = 'u8[24576]{0}', space=vmem, size = 0x6000, scoped, tag = 'input window, operand 1']
    #allocation6 [shape = 'u8[16384]{0}', space=vmem, size = 0x4000, scoped, tag = 'output window, operand 0']
    %7 = vsyncpa [#allocation3], 0
    %s8 = scalar_lea.sflag [#allocation3], 1
    %9 = vsyncpa %s8, 0
    %10 = vsyncpa [#allocation4], 0
    %s11 = scalar_lea.sflag [#allocation4], 1
    %12 = vsyncpa %s11, 0
    loop: start=0, step=1, limit=10
    $region2: #{tpu_custom_call.1} parent=1 // loop_pre_header
      _
    $region3: #{tpu_custom_call.1} parent=1 // loop_header
      %s14 = sphi 0, %s18
      %p15 = scmp.ge.s32.totalorder %s14, 10
      %s21 = sphi 0, %s33
      %s22 = sphi 0, %s29
      %s23 = sphi 0, %s21
      %s24 = sphi 0, %s22
      %s25 = sphi 0, %s23
      %s26 = sphi 0, %s24
      %s38 = sphi 0, %s40
      %s41 = sphi 0, %s38
      %s42 = sphi 0, %s41
      %s58 = sphi 0, %s42
      %s64 = sphi 0, %s66
      %s67 = sphi 0, %s64
      %s68 = sphi 0, %s67
      %s84 = sphi 0, %s68
      %s92 = sphi 0, %s94
      %s95 = sphi 0, %s92
      %s96 = sphi 0, %s95
      %s112 = sphi 0, %s96
    $region4: #{tpu_custom_call.1} parent=1 // loop_header_branch
      %17 = sbr.rel (%p15) target = $region8
    $region5: #{tpu_custom_call.1} parent=1 // loop_body
      %s19 = ssub.s32 %s14, 1
      %s20 = ssub.s32 %s14, 2
      %s27 = sadd.s32 1, %s22
      %p28 = scmp.ge.s32.totalorder %s27, 2
      %s29 = scalar_select %p28, 0, %s27
      %s30 = sadd.s32 1, %s21
      %s31 = scalar_select %p28, %s30, %s21
      %p32 = scmp.ge.s32.totalorder %s31, 4
      %s33 = scalar_select %p32, 0, %s31
      %s34 = ssub.s32 %s22, %s29
      %s35 = ssub.s32 %s21, %s33
      %s36 = sor.u32 %s34, %s35
      %p37 = scmp.eq.s32.totalorder %s36, 0
      %s39 = sadd.s32 %s38, 1
      %s40 = scalar_select %p37, %s38, %s39
      %p43 = pneg %p37
      %p44 = scmp.eq.s32.totalorder %s14, 7
      %p45 = por %p43, %p44
      %p46 = scmp.ne.s32.totalorder %s38, %s41
      %p47 = scmp.eq.s32.totalorder %s14, 0
      %p48 = por %p46, %p47
      %p49 = scmp.ne.s32.totalorder %s38, %s41
      %p50 = scmp.eq.s32.totalorder %s19, 7
      %p51 = por %p49, %p50
      %p52 = scmp.ne.s32.totalorder %s41, %s42
      %p53 = scmp.eq.s32.totalorder %s19, 0
      %p54 = por %p52, %p53
      %p55 = scmp.ne.s32.totalorder %s41, %s42
      %p56 = scmp.eq.s32.totalorder %s20, 7
      %p57 = por %p55, %p56
      %p59 = scmp.ne.s32.totalorder %s42, %s58
      %p60 = scmp.eq.s32.totalorder %s20, 0
      %p61 = por %p59, %p60
      %s62 = ssub.s32 %s21, %s33
      %p63 = scmp.eq.s32.totalorder %s62, 0
      %s65 = sadd.s32 %s64, 1
      %s66 = scalar_select %p63, %s64, %s65
      %p69 = pneg %p63
      %p70 = scmp.eq.s32.totalorder %s14, 7
      %p71 = por %p69, %p70
      %p72 = scmp.ne.s32.totalorder %s64, %s67
      %p73 = scmp.eq.s32.totalorder %s14, 0
      %p74 = por %p72, %p73
      %p75 = scmp.ne.s32.totalorder %s64, %s67
      %p76 = scmp.eq.s32.totalorder %s19, 7
      %p77 = por %p75, %p76
      %p78 = scmp.ne.s32.totalorder %s67, %s68
      %p79 = scmp.eq.s32.totalorder %s19, 0
      %p80 = por %p78, %p79
      %p81 = scmp.ne.s32.totalorder %s67, %s68
      %p82 = scmp.eq.s32.totalorder %s20, 7
      %p83 = por %p81, %p82
      %p85 = scmp.ne.s32.totalorder %s68, %s84
      %p86 = scmp.eq.s32.totalorder %s20, 0
      %p87 = por %p85, %p86
      %s88 = ssub.s32 %s22, %s29
      %s89 = ssub.s32 %s21, %s33
      %s90 = sor.u32 %s88, %s89
      %p91 = scmp.eq.s32.totalorder %s90, 0
      %s93 = sadd.s32 %s92, 1
      %s94 = scalar_select %p91, %s92, %s93
      %p97 = pneg %p91
      %p98 = scmp.eq.s32.totalorder %s14, 7
      %p99 = por %p97, %p98
      %p100 = scmp.ne.s32.totalorder %s92, %s95
      %p101 = scmp.eq.s32.totalorder %s14, 0
      %p102 = por %p100, %p101
      %p103 = scmp.ne.s32.totalorder %s92, %s95
      %p104 = scmp.eq.s32.totalorder %s19, 7
      %p105 = por %p103, %p104
      %p106 = scmp.ne.s32.totalorder %s95, %s96
      %p107 = scmp.eq.s32.totalorder %s19, 0
      %p108 = por %p106, %p107
      %p109 = scmp.ne.s32.totalorder %s95, %s96
      %p110 = scmp.eq.s32.totalorder %s20, 7
      %p111 = por %p109, %p110
      %p113 = scmp.ne.s32.totalorder %s96, %s112
      %p114 = scmp.eq.s32.totalorder %s20, 0
      %p115 = por %p113, %p114
      %p116 = scmp.le.s32.totalorder 1, %s14
      %p117 = scmp.lt.s32.totalorder %s14, 9
      %p118 = pnand %p116, %p117
      %p119 = pneg %p118
      // Predicated region
      $region9: #{tpu_custom_call.1} parent=5 // pred_check
        _
      $region10: #{tpu_custom_call.1} parent=5 // pred_check_branch
        %121 = sbr.rel (%p118) target = $region12
      $region11: #{tpu_custom_call.1} parent=5 // pred_region
        %s122 = ssub.s32 %s14, 1
      $region12: #{tpu_custom_call.1} parent=5 // pred_fallthru
        _
      %p123 = scmp.lt.s32.totalorder %s14, 8
      // Predicated region
      $region13: #{tpu_custom_call.1} parent=5 // pred_check
        %p124 = pneg %p123
      $region14: #{tpu_custom_call.1} parent=5 // pred_check_branch
        %126 = sbr.rel (%p124) target = $region16
      $region15: #{tpu_custom_call.1} parent=5 // pred_region
        // Predicated region
        $region17: #{tpu_custom_call.1} parent=15 // pred_check
          %p127 = pneg %p48
        $region18: #{tpu_custom_call.1} parent=15 // pred_check_branch
          %129 = sbr.rel (%p127) target = $region20
        $region19: #{tpu_custom_call.1} parent=15 // pred_region
          %s130 = sand.u32 %s38, 1
          %s131 = scalar_lea.sflag [#allocation3], %s130
          %s132 = sand.u32 %s38, 1
          %s133 = smul.addr %s132, 16
          %s134 = scalar_lea.vmem [#allocation2], %s133
          %136 = vsyncadd %s131, 0
          %s137 = smul.addr %s21, 2
          %s138 = smul.addr %s22, 8
          %s139 = sadd.s32 %s137, %s138
          %s140 = smul.addr %s139, 8
          %s141 = scalar_lea.hbm %s0, %s140
          %s143 = sshll.u32 %s141, 4
          %s144 = int_to_ptr.hbm [resolvable:$true] %s143
          %s145 = sshll.u32 %s134, 4
          %s146 = int_to_ptr.vmem [resolvable:$true] %s145
          %148 = dma.hbm_to_vmem [thread:$0]  %s144, 256, %s146, %s131
        $region20: #{tpu_custom_call.1} parent=15 // pred_fallthru
          _
        // Predicated region
        $region21: #{tpu_custom_call.1} parent=15 // pred_check
          %p149 = pneg %p74
        $region22: #{tpu_custom_call.1} parent=15 // pred_check_branch
          %151 = sbr.rel (%p149) target = $region24
        $region23: #{tpu_custom_call.1} parent=15 // pred_region
          %s152 = sand.u32 %s64, 1
          %s153 = sand.u32 %s64, 1
          %s154 = smul.addr %s153, 24
          %s155 = scalar_lea.vmem [#allocation5], %s154
          %s156 = smul.addr %s21, 8
          %s157 = scalar_lea.vmem %s1, %s156
          // Predicated region
          $region25: #{tpu_custom_call.1} parent=23 // pred_check
            _
          $region26: #{tpu_custom_call.1} parent=23 // pred_check_branch
            %159 = sbr.rel (0) target = $region28
          $region27: #{tpu_custom_call.1} parent=23 // pred_region
            // Predicated region
            $region29: #{tpu_custom_call.1} parent=27 // pred_check
              _
            $region30: #{tpu_custom_call.1} parent=27 // pred_check_branch
              %161 = sbr.rel (0) target = $region32
            $region31: #{tpu_custom_call.1} parent=27 // pred_region
              // Predicated region
              $region44: #{tpu_custom_call.1} parent=31 // pred_check
                _
              $region45: #{tpu_custom_call.1} parent=31 // pred_check_branch
                %181 = sbr.rel (0) target = $region47
              $region46: #{tpu_custom_call.1} parent=31 // pred_region
                loop: start=0, step=1, limit=1
                $region48: #{tpu_custom_call.1} parent=46 // loop_pre_header
                  _
                $region49: #{tpu_custom_call.1} parent=46 // loop_header
                  %s183 = sphi 0, %s187
                  %p184 = scmp.ge.s32.totalorder %s183, 1
                  %s188 = sphi %s157, %s157
                  %s189 = sphi %s155, %s155
                $region50: #{tpu_custom_call.1} parent=46 // loop_header_branch
                  %186 = sbr.rel (%p184) target = $region54
                $region51: #{tpu_custom_call.1} parent=46 // loop_body
                  %v190 = vld [vmem:[%s188] sm:$0xff]
                  %191 = vst [vmem:[%s189] sm:$0xff] %v190
                  %v192 = vld [vmem:[%s188 + $0x20] sm:$0xff]
                  %193 = vst [vmem:[%s189 + $0x8] sm:$0xff] %v192
                  %v194 = vld [vmem:[%s188 + $0x40] sm:$0xff]
                  %195 = vst [vmem:[%s189 + $0x10] sm:$0xff] %v194
                $region52: #{tpu_custom_call.1} parent=46 // loop_footer
                  %s187 = sadd.s32 1, %s183
                $region53: #{tpu_custom_call.1} parent=46 // loop_footer_branch
                  %182 = sbr.rel target = $region49
                $region54: #{tpu_custom_call.1} parent=46 // loop_exit
                  _
              $region47: #{tpu_custom_call.1} parent=31 // pred_fallthru
                _
              // Predicated region
              $region55: #{tpu_custom_call.1} parent=31 // pred_check
                _
              $region56: #{tpu_custom_call.1} parent=31 // pred_check_branch
                %197 = sbr.rel target = $region58
              $region57: #{tpu_custom_call.1} parent=31 // pred_region
                _
              $region58: #{tpu_custom_call.1} parent=31 // pred_fallthru
                _
            $region32: #{tpu_custom_call.1} parent=27 // pred_fallthru
              _
            // Predicated region
            $region33: #{tpu_custom_call.1} parent=27 // pred_check
              _
            $region34: #{tpu_custom_call.1} parent=27 // pred_check_branch
              %163 = sbr.rel target = $region36
            $region35: #{tpu_custom_call.1} parent=27 // pred_region
              %s165 = ssub.s32 256, 1
              loop: start=0, step=1, limit=1
              $region37: #{tpu_custom_call.1} parent=35 // loop_pre_header
                _
              $region38: #{tpu_custom_call.1} parent=35 // loop_header
                %s167 = sphi 0, %s171
                %p168 = scmp.ge.s32.totalorder %s167, 1
                %s172 = sphi %s157, %s157
                %s173 = sphi %s155, %s155
              $region39: #{tpu_custom_call.1} parent=35 // loop_header_branch
                %170 = sbr.rel (%p168) target = $region43
              $region40: #{tpu_custom_call.1} parent=35 // loop_body
                %v174 = vld [vmem:[%s172] sm:%s165]
                %175 = vst [vmem:[%s173] sm:%s165] %v174
                %v176 = vld [vmem:[%s172 + $0x20] sm:%s165]
                %177 = vst [vmem:[%s173 + $0x8] sm:%s165] %v176
                %v178 = vld [vmem:[%s172 + $0x40] sm:%s165]
                %179 = vst [vmem:[%s173 + $0x10] sm:%s165] %v178
              $region41: #{tpu_custom_call.1} parent=35 // loop_footer
                %s171 = sadd.s32 1, %s167
              $region42: #{tpu_custom_call.1} parent=35 // loop_footer_branch
                %166 = sbr.rel target = $region38
              $region43: #{tpu_custom_call.1} parent=35 // loop_exit
                _
            $region36: #{tpu_custom_call.1} parent=27 // pred_fallthru
              _
          $region28: #{tpu_custom_call.1} parent=23 // pred_fallthru
            _
          %198 = vnop
        $region24: #{tpu_custom_call.1} parent=15 // pred_fallthru
          _
      $region16: #{tpu_custom_call.1} parent=5 // pred_fallthru
        _
      %p199 = scmp.le.s32.totalorder 1, %s14
      %p200 = scmp.lt.s32.totalorder %s14, 9
      %p201 = pnand %p199, %p200
      %p202 = pneg %p201
      // Predicated region
      $region59: #{tpu_custom_call.1} parent=5 // pred_check
        _
      $region60: #{tpu_custom_call.1} parent=5 // pred_check_branch
        %204 = sbr.rel (%p201) target = $region62
      $region61: #{tpu_custom_call.1} parent=5 // pred_region
        %s205 = ssub.s32 %s14, 1
        %s206 = sand.u32 %s41, 1
        %s207 = scalar_lea.sflag [#allocation3], %s206
        %s208 = sand.u32 %s41, 1
        %s209 = smul.addr %s208, 16
        %s210 = scalar_lea.vmem [#allocation2], %s209
        // Predicated region
        $region63: #{tpu_custom_call.1} parent=61 // pred_check
          %p211 = pneg %p54
        $region64: #{tpu_custom_call.1} parent=61 // pred_check_branch
          %213 = sbr.rel (%p211) target = $region66
        $region65: #{tpu_custom_call.1} parent=61 // pred_region
          %215 = dma.done %s207, 256
        $region66: #{tpu_custom_call.1} parent=61 // pred_fallthru
          _
        %s216 = sand.u32 %s67, 1
        %s217 = sand.u32 %s67, 1
        %s218 = smul.addr %s217, 24
        %s219 = scalar_lea.vmem [#allocation5], %s218
        // Predicated region
        $region67: #{tpu_custom_call.1} parent=61 // pred_check
          %p220 = pneg %p80
        $region68: #{tpu_custom_call.1} parent=61 // pred_check_branch
          %222 = sbr.rel (%p220) target = $region70
        $region69: #{tpu_custom_call.1} parent=61 // pred_region
          _
        $region70: #{tpu_custom_call.1} parent=61 // pred_fallthru
          _
        %s223 = sand.u32 %s41, 1
        %s224 = scalar_lea.sflag [#allocation3], %s223
        %s225 = sand.u32 %s41, 1
        %s226 = smul.addr %s225, 16
        %s227 = scalar_lea.vmem [#allocation2], %s226
        %p228 = pneg %p54
        %p229 = pneg %p51
        %s230 = sand.u32 %s67, 1
        %s231 = sand.u32 %s67, 1
        %s232 = smul.addr %s231, 24
        %s233 = scalar_lea.vmem [#allocation5], %s232
        %p234 = pneg %p80
        %p235 = pneg %p77
        %p236 = pneg %p108
        %p237 = pneg %p105
        %s238 = sand.u32 %s95, 1
        %s239 = scalar_lea.sflag [#allocation4], %s238
        %s240 = sand.u32 %s95, 1
        %s241 = smul.addr %s240, 16
        %s242 = scalar_lea.vmem [#allocation6], %s241
        %v243 = vld [vmem:[%s210] sm:$0xff]
        %v244 = vld [vmem:[%s210 + $0x8] sm:$0xff]
        %v245 = vadd.f32 %v243, %v244
        %246 = vadd.xlane.f32.xlu0 %v245
        %v247 = vpop.xlane.xlu0 %246
        %v248 = vrcp.pop 256.0
        %v249 = vmul.f32 256.0, %v248
        %v250 = vsub.f32 1.0, %v249
        %v251 = vmul.f32 %v248, %v250
        %v252 = vadd.f32 %v248, %v251
        %vm253 = vweird.f32 %v248
        %v254 = vsel %vm253, %v248, %v252
        %v255 = vmul.f32 %v247, %v254
        %v256 = vsub.f32 %v243, %v255
        %v257 = vsub.f32 %v244, %v255
        %v258 = vmul.f32 %v256, %v256
        %v259 = vmul.f32 %v257, %v257
        %v260 = vadd.f32 %v258, %v259
        %261 = vadd.xlane.f32.xlu0 %v260
        %v262 = vpop.xlane.xlu0 %261
        %v263 = vmul.f32 %v262, 0.003921569
        %v264 = vmax.f32 %v263, 0.0
        %v265 = vrsqrt.pop %v264
        %v266 = vmul.f32 %v265, %v264
        %v267 = vmul.f32 %v266, %v265
        %v268 = vmul.f32 0.5, %v267
        %v269 = vsub.f32 1.5, %v268
        %v270 = vmul.f32 %v265, %v269
        %v271 = vmul.f32 %v264, %v270
        %vm272 = vcmp.eq.f32.partialorder %v264, inf
        %v273 = vsel %vm272, %v264, %v271
        %vm274 = vcmp.eq.f32.partialorder %v264, 0.0
        %v275 = vand.u32 %v264, 2147483648
        %v276 = vsel %vm274, %v275, %v273
        %v277 = vld [vmem:[%s219] sm:$0xff]
        %v278 = vld [vmem:[%s219 + $0x8] sm:$0xff]
        %v279 = vld [vmem:[%s219 + $0x10] sm:$0xff]
        %v280 = vadd.f32 %v276, 1e-05
        %v281 = vrcp.pop %v280
        %v282 = vmul.f32 %v280, %v281
        %v283 = vsub.f32 1.0, %v282
        %v284 = vmul.f32 %v281, %v283
        %v285 = vadd.f32 %v281, %v284
        %vm286 = vweird.f32 %v280
        %vm287 = vweird.f32 %v281
        %vm288 = vmor %vm286, %vm287
        %v289 = vsel %vm288, %v281, %v285
        %v290 = vand.u32 2147483647, %v280
        %vm291 = vcmp.eq.f32.partialorder %v290, 8.507059e+37
        %v292 = vand.u32 %v280, 2147483648
        %v293 = vor.u32 1.1754944e-38, %v292
        %v294 = vsel %vm291, %v293, %v289
        %v295 = vmul.f32 %v294, %v278
        %297 = vset.pattern.permute.xlu0 0
        %298 = vperm.xlu0 %297, %v277
        %v299 = vpop.permute.xlu0 %298
        %v301 = vmul.f32 %v299, %v243
        %v302 = vmul.f32 %v299, %v244
        %v303 = vmul.f32 %v301, 0.5
        %v304 = vmul.f32 %v302, 0.5
        %v305 = vtanh.pop %v303
        %v306 = vtanh.pop %v304
        %v307 = vmul.f32 %v305, 0.5
        %v308 = vmul.f32 %v306, 0.5
        %v309 = vadd.f32 %v307, 0.5
        %v310 = vadd.f32 %v308, 0.5
        %v311 = vmul.f32 %v243, %v309
        %v312 = vmul.f32 %v244, %v310
        %314 = vset.pattern.permute.xlu0 0
        %315 = vperm.xlu0 %314, %v295
        %v316 = vpop.permute.xlu0 %315
        %v318 = vmul.f32 %v311, %v316
        %v319 = vmul.f32 %v312, %v316
        %321 = vset.pattern.permute.xlu0 0
        %322 = vperm.xlu0 %321, %v279
        %v323 = vpop.permute.xlu0 %322
        %v325 = vadd.f32 %v318, %v323
        %v326 = vadd.f32 %v319, %v323
        %327 = vst [vmem:[%s242] sm:$0xff] %v325
        %328 = vst [vmem:[%s242 + $0x8] sm:$0xff] %v326
        %s329 = sand.u32 %s95, 1
        %s330 = scalar_lea.sflag [#allocation4], %s329
        %s331 = sand.u32 %s95, 1
        %s332 = smul.addr %s331, 16
        %s333 = scalar_lea.vmem [#allocation6], %s332
        // Predicated region
        $region71: #{tpu_custom_call.1} parent=61 // pred_check
          %p334 = pneg %p105
        $region72: #{tpu_custom_call.1} parent=61 // pred_check_branch
          %336 = sbr.rel (%p334) target = $region74
        $region73: #{tpu_custom_call.1} parent=61 // pred_region
          %338 = vsyncadd %s330, 0
          %s339 = smul.addr %s23, 2
          %s340 = smul.addr %s24, 8
          %s341 = sadd.s32 %s339, %s340
          %s342 = smul.addr %s341, 8
          %s343 = scalar_lea.hbm %s2, %s342
          %s345 = sshll.u32 %s333, 4
          %s346 = int_to_ptr.vmem [resolvable:$true] %s345
          %s347 = sshll.u32 %s343, 4
          %s348 = int_to_ptr.hbm [resolvable:$true] %s347
          %350 = dma.vmem_to_hbm [thread:$0]  %s346, 256, %s348, %s330
        $region74: #{tpu_custom_call.1} parent=61 // pred_fallthru
          _
      $region62: #{tpu_custom_call.1} parent=5 // pred_fallthru
        _
      %p351 = scmp.le.s32.totalorder 2, %s14
      // Predicated region
      $region75: #{tpu_custom_call.1} parent=5 // pred_check
        %p352 = pneg %p351
      $region76: #{tpu_custom_call.1} parent=5 // pred_check_branch
        %354 = sbr.rel (%p352) target = $region78
      $region77: #{tpu_custom_call.1} parent=5 // pred_region
        %s355 = ssub.s32 %s14, 2
        // Predicated region
        $region79: #{tpu_custom_call.1} parent=77 // pred_check
          %p356 = pneg %p111
        $region80: #{tpu_custom_call.1} parent=77 // pred_check_branch
          %358 = sbr.rel (%p356) target = $region82
        $region81: #{tpu_custom_call.1} parent=77 // pred_region
          %s359 = sand.u32 %s96, 1
          %s360 = scalar_lea.sflag [#allocation4], %s359
          %s361 = sand.u32 %s96, 1
          %s362 = smul.addr %s361, 16
          %s363 = scalar_lea.vmem [#allocation6], %s362
          %365 = dma.done %s360, 256
        $region82: #{tpu_custom_call.1} parent=77 // pred_fallthru
          _
      $region78: #{tpu_custom_call.1} parent=5 // pred_fallthru
        _
    $region6: #{tpu_custom_call.1} parent=1 // loop_footer
      %s18 = sadd.s32 1, %s14
    $region7: #{tpu_custom_call.1} parent=1 // loop_footer_branch
      %13 = sbr.rel target = $region3
    $region8: #{tpu_custom_call.1} parent=1 // loop_exit
      _
    %366 = vsyncpa [#allocation3], 1
    %s367 = scalar_lea.sflag [#allocation3], 1
    %368 = vsyncpa %s367, 1
    %369 = vsyncpa [#allocation4], 1
    %s370 = scalar_lea.sflag [#allocation4], 1
    %371 = vsyncpa %s370, 1

</llo_original>
